<compile_context>
chip_gen: v5e
topology: v5e:2x2
jax: 0.10.0
libtpu: 0.0.40
codegen_flags: <defaults>
</compile_context>

<pallas_src>
import jax
import jax.numpy as jnp
import numpy as np
from jax.experimental import pallas as pl
from jax.experimental.pallas import tpu as pltpu


def attention_kernel(fm_ref, h_ref, w_enc_ref, w_dec_ref, bias_ref,
                     w_lin_ref, expand_ref, pool_ref, out_ref):
    """One batch block; every large tensor is a lane-dense 2-D slab.

    fm_ref     : (BT, L*F)   flattened feature map
    h_ref      : (BT, H)     hidden state
    w_enc_ref  : (L*F, L*A)  kron(I_L, W_enc)   block-diagonal encoder weight
    w_dec_ref  : (H,   L*A)  W_dec tiled L times along the output axis
    bias_ref   : (1,   L*A)  (b_enc + b_dec) tiled L times
    w_lin_ref  : (L*A, L)    kron(I_L, w_lin^T) per-location A->1 contraction
    expand_ref : (L,   L*F)  kron(I_L, 1_F)     repeats score over F lanes
    pool_ref   : (L*F, F)    tile(I_F, (L,1))   sums over the L locations
    out_ref    : (BT, F)
    """
    fm = fm_ref[...]                                                     # (BT, L*F)

    # Encoder / decoder projections as lane-dense (BT, L*A) slabs (single MXU
    # ops per block; no per-sample or per-location loops, no reshapes).
    enc = jnp.dot(fm, w_enc_ref[...], preferred_element_type=jnp.float32)        # (BT, L*A)
    dec = jnp.dot(h_ref[...], w_dec_ref[...], preferred_element_type=jnp.float32)  # (BT, L*A)

    # tanh(enc + dec.unsqueeze(1) + biases) -- lane-dense EUP work.
    total = jnp.tanh(enc + dec + bias_ref[...])                          # (BT, L*A)

    # A -> 1 linear per map location (b_lin dropped: log_softmax shift-invariant).
    logits = jnp.dot(total, w_lin_ref[...], preferred_element_type=jnp.float32)  # (BT, L)

    # log_softmax over map locations (PyTorch dim=1).
    m = jnp.max(logits, axis=-1, keepdims=True)                          # (BT, 1)
    lse = jnp.log(jnp.sum(jnp.exp(logits - m), axis=-1, keepdims=True)) + m
    score = logits - lse                                                 # (BT, L)

    # out[b, f] = sum_l fm[b, l, f] * score[b, l]
    # done as: broadcast score over the F lanes of each location, multiply,
    # then pool over locations -- all via small constant matmuls (no reshape).
    score_rep = jnp.dot(score, expand_ref[...], preferred_element_type=jnp.float32)  # (BT, L*F)
    out_ref[...] = jnp.dot(fm * score_rep, pool_ref[...],
                           preferred_element_type=jnp.float32)           # (BT, F)


def _pick_block_batch(B, L, F, A):
    """Batch-block size: ~1 MiB fm tiles, multiple of 8, VMEM- and megacore-aware."""
    fm_bytes_per_sample = L * F * 4
    target = max(8, (1 << 20) // max(fm_bytes_per_sample, 1))     # ~1 MiB fm tile
    # Rough per-sample resident VMEM (double-buffered fm + enc/dec/tanh slabs);
    # keep the block comfortably under the 32 MiB scoped limit (v7x: 64 MiB phys).
    vmem_per_sample = 4 * (3 * L * F + 4 * L * A)
    target = min(target, max(8, (16 << 20) // max(vmem_per_sample, 1)), 2048)
    if B > 8:
        # Ensure >= 2 grid blocks so v7x's two TensorCores both get work.
        half = ((-(-B // 2)) + 7) // 8 * 8
        target = min(target, half)
    bt = min(target, -(-B // 8) * 8)
    return max(8, (bt + 7) // 8 * 8)


def attention_forward(feature_map, hidden_state, params, *, block_batch=None):
    B, L, F = feature_map.shape
    H = hidden_state.shape[1]
    A = params["w_enc"].shape[1]

    BT = _pick_block_batch(B, L, F, A) if block_batch is None else block_batch
    n_blocks = pl.cdiv(B, BT)
    B_pad = n_blocks * BT

    # Lane-dense feature map: (B, L*F). Zero-pad the batch (padded rows give
    # finite logits and zero outputs; sliced off below).
    fm_flat = feature_map.reshape(B, L * F)
    if B_pad != B:
        fm_flat = jnp.pad(fm_flat, ((0, B_pad - B), (0, 0)))
        hidden_state = jnp.pad(hidden_state, ((0, B_pad - B), (0, 0)))

    # Constant structure matrices (built once, wrapper-side).
    eye_l = jnp.eye(L, dtype=jnp.float32)
    w_enc_blk = jnp.kron(eye_l, params["w_enc"])                        # (L*F, L*A)
    w_dec_t = jnp.tile(params["w_dec"], (1, L))                         # (H,   L*A)
    bias_t = jnp.tile(params["b_enc"] + params["b_dec"], (1, L))        # (1,   L*A)
    w_lin_blk = jnp.kron(eye_l, params["w_lin"].reshape(A, 1))          # (L*A, L)
    expand = jnp.kron(eye_l, jnp.ones((1, F), jnp.float32))             # (L,   L*F)
    pool = jnp.tile(jnp.eye(F, dtype=jnp.float32), (L, 1))              # (L*F, F)
    # TODO(synk): optionally cast fm/w_enc to bf16 for HBM traffic; kept f32 for tolerance.

    out = pl.pallas_call(
        attention_kernel,
        out_shape=jax.ShapeDtypeStruct((B_pad, F), jnp.float32),
        grid=(n_blocks,),
        in_specs=[
            pl.BlockSpec((BT, L * F), lambda b: (b, 0)),        # feature_map tile (lane-dense)
            pl.BlockSpec((BT, H), lambda b: (b, 0)),            # hidden_state tile
            pl.BlockSpec((L * F, L * A), lambda b: (0, 0)),     # kron(I_L, W_enc)
            pl.BlockSpec((H, L * A), lambda b: (0, 0)),         # tiled W_dec
            pl.BlockSpec((1, L * A), lambda b: (0, 0)),         # tiled (b_enc + b_dec)
            pl.BlockSpec((L * A, L), lambda b: (0, 0)),         # kron(I_L, w_lin^T)
            pl.BlockSpec((L, L * F), lambda b: (0, 0)),         # score -> lanes expander
            pl.BlockSpec((L * F, F), lambda b: (0, 0)),         # sum-over-L pooler
        ],
        out_specs=pl.BlockSpec((BT, F), lambda b: (b, 0)),
        compiler_params=pltpu.CompilerParams(
            dimension_semantics=("parallel",),
            vmem_limit_bytes=32 * 1024 * 1024,
        ),
    )(fm_flat, hidden_state, w_enc_blk, w_dec_t, bias_t, w_lin_blk, expand, pool)

    return out[:B]


def attention_reference(feature_map, hidden_state, params):
    enc = feature_map @ params["w_enc"] + params["b_enc"]             # (B, L, A)
    dec = hidden_state @ params["w_dec"] + params["b_dec"]            # (B, A)
    total = jnp.tanh(enc + dec[:, None, :])                           # (B, L, A)
    w = jnp.sum(total * params["w_lin"], axis=-1, keepdims=True) + params["b_lin"][0, 0]
    score = jax.nn.log_softmax(w, axis=1)                             # (B, L, 1)
    return jnp.sum(feature_map * score, axis=1)                       # (B, F)


def _make_inputs(key, B, L, F, H, A):
    k_fm, k_h, k_we, k_be, k_wd, k_bd, k_wl, k_bl = jax.random.split(key, 8)
    feature_map = jax.random.normal(k_fm, (B, L, F), jnp.float32)
    hidden_state = jax.random.normal(k_h, (B, H), jnp.float32)
    params = {
        "w_enc": jax.random.normal(k_we, (F, A), jnp.float32) * (1.0 / np.sqrt(F)),
        "b_enc": jax.random.normal(k_be, (1, A), jnp.float32) * 0.1,
        "w_dec": jax.random.normal(k_wd, (H, A), jnp.float32) * (1.0 / np.sqrt(H)),
        "b_dec": jax.random.normal(k_bd, (1, A), jnp.float32) * 0.1,
        "w_lin": jax.random.normal(k_wl, (1, A), jnp.float32) * (1.0 / np.sqrt(A)),
        "b_lin": jax.random.normal(k_bl, (1, 1), jnp.float32) * 0.1,
    }
    return feature_map, hidden_state, params


if __name__ == "__main__":
    # Shapes consistent with the module's forward.
    map_size = 16         # L: number of spatial locations
    feature_size = 32     # F
    hidden_size = 32      # H
    attention_size = 32   # A

    # --- primary small check (B=2, single padded block) ---
    fm, h, params = _make_inputs(jax.random.PRNGKey(0), 2, map_size, feature_size,
                                 hidden_size, attention_size)
    out = jax.block_until_ready(attention_forward(fm, h, params))
    ref = attention_reference(fm, h, params)
    np.testing.assert_allclose(np.asarray(out), np.asarray(ref), rtol=2e-4, atol=2e-4)

    # --- multi-block + batch-padding check (B not a multiple of BT, grid > 1) ---
    fm2, h2, params2 = _make_inputs(jax.random.PRNGKey(1), 34, map_size, feature_size,
                                    hidden_size, attention_size)
    out2 = jax.block_until_ready(attention_forward(fm2, h2, params2))
    ref2 = attention_reference(fm2, h2, params2)
    np.testing.assert_allclose(np.asarray(out2), np.asarray(ref2), rtol=2e-4, atol=2e-4)

    print("KERNEL_OK")
</pallas_src>

<mosaic_0001>
module attributes {stable_mosaic.version = 11 : i64} {
  func.func @attention_kernel(%arg0: i32, %arg1: memref<8x512xf32, #tpu.memory_space<vmem>>, %arg2: memref<8x32xf32, #tpu.memory_space<vmem>>, %arg3: memref<512x512xf32, #tpu.memory_space<vmem>>, %arg4: memref<32x512xf32, #tpu.memory_space<vmem>>, %arg5: memref<1x512xf32, #tpu.memory_space<vmem>>, %arg6: memref<512x16xf32, #tpu.memory_space<vmem>>, %arg7: memref<16x512xf32, #tpu.memory_space<vmem>>, %arg8: memref<512x32xf32, #tpu.memory_space<vmem>>, %arg9: memref<8x32xf32, #tpu.memory_space<vmem>>) attributes {dimension_semantics = [#tpu.dimension_semantics<parallel>], iteration_bounds = array<i64: 1>, scalar_prefetch = 0 : i64, scratch_operands = 0 : i64, tpu.core_type = #tpu.core_type<tc>, window_params = [{transform_indices = @transform_0, window_bounds = array<i64: 8, 512>}, {transform_indices = @transform_1, window_bounds = array<i64: 8, 32>}, {pipeline_mode = #tpu.pipeline_mode<synchronous>, transform_indices = @transform_2, window_bounds = array<i64: 512, 512>}, {pipeline_mode = #tpu.pipeline_mode<synchronous>, transform_indices = @transform_3, window_bounds = array<i64: 32, 512>}, {pipeline_mode = #tpu.pipeline_mode<synchronous>, transform_indices = @transform_4, window_bounds = array<i64: 1, 512>}, {pipeline_mode = #tpu.pipeline_mode<synchronous>, transform_indices = @transform_5, window_bounds = array<i64: 512, 16>}, {pipeline_mode = #tpu.pipeline_mode<synchronous>, transform_indices = @transform_6, window_bounds = array<i64: 16, 512>}, {pipeline_mode = #tpu.pipeline_mode<synchronous>, transform_indices = @transform_7, window_bounds = array<i64: 512, 32>}, {transform_indices = @transform_8, window_bounds = array<i64: 8, 32>}]} {
    %c0 = arith.constant 0 : index
    %c0_0 = arith.constant 0 : index
    %0 = vector.load %arg1[%c0, %c0_0] : memref<8x512xf32, #tpu.memory_space<vmem>>, vector<8x512xf32>
    %c0_1 = arith.constant 0 : index
    %c0_2 = arith.constant 0 : index
    %1 = vector.load %arg3[%c0_1, %c0_2] : memref<512x512xf32, #tpu.memory_space<vmem>>, vector<512x512xf32>
    %cst = arith.constant dense<0.000000e+00> : vector<8x512xf32>
    %2 = tpu.matmul %0, %1, %cst {dimension_numbers = #tpu.dot_dimension_numbers<[1], [0], [0], [1], [0, 0, 1, 1], [], []>} : vector<8x512xf32>, vector<512x512xf32>, vector<8x512xf32> -> vector<8x512xf32>
    %c0_3 = arith.constant 0 : index
    %c0_4 = arith.constant 0 : index
    %3 = vector.load %arg2[%c0_3, %c0_4] : memref<8x32xf32, #tpu.memory_space<vmem>>, vector<8x32xf32>
    %c0_5 = arith.constant 0 : index
    %c0_6 = arith.constant 0 : index
    %4 = vector.load %arg4[%c0_5, %c0_6] : memref<32x512xf32, #tpu.memory_space<vmem>>, vector<32x512xf32>
    %cst_7 = arith.constant dense<0.000000e+00> : vector<8x512xf32>
    %5 = tpu.matmul %3, %4, %cst_7 {dimension_numbers = #tpu.dot_dimension_numbers<[1], [0], [0], [1], [0, 0, 1, 1], [], []>} : vector<8x32xf32>, vector<32x512xf32>, vector<8x512xf32> -> vector<8x512xf32>
    %6 = arith.addf %2, %5 : vector<8x512xf32>
    %c0_8 = arith.constant 0 : index
    %c0_9 = arith.constant 0 : index
    %7 = vector.load %arg5[%c0_8, %c0_9] : memref<1x512xf32, #tpu.memory_space<vmem>>, vector<1x512xf32>
    %8 = vector.broadcast %7 : vector<1x512xf32> to vector<8x512xf32>
    %9 = arith.addf %6, %8 : vector<8x512xf32>
    %10 = math.tanh %9 : vector<8x512xf32>
    %c0_10 = arith.constant 0 : index
    %c0_11 = arith.constant 0 : index
    %11 = vector.load %arg6[%c0_10, %c0_11] : memref<512x16xf32, #tpu.memory_space<vmem>>, vector<512x16xf32>
    %cst_12 = arith.constant dense<0.000000e+00> : vector<8x16xf32>
    %12 = tpu.matmul %10, %11, %cst_12 {dimension_numbers = #tpu.dot_dimension_numbers<[1], [0], [0], [1], [0, 0, 1, 1], [], []>} : vector<8x512xf32>, vector<512x16xf32>, vector<8x16xf32> -> vector<8x16xf32>
    %cst_13 = arith.constant dense<0xFF800000> : vector<8xf32>
    %13 = vector.multi_reduction <maximumf>, %12, %cst_13 [1] : vector<8x16xf32> to vector<8xf32>
    %14 = vector.shape_cast %13 : vector<8xf32> to vector<8x1xf32>
    %15 = vector.broadcast %14 : vector<8x1xf32> to vector<8x16xf32>
    %16 = arith.subf %12, %15 : vector<8x16xf32>
    %17 = math.exp %16 : vector<8x16xf32>
    %cst_14 = arith.constant dense<0.000000e+00> : vector<8xf32>
    %18 = vector.multi_reduction <add>, %17, %cst_14 [1] : vector<8x16xf32> to vector<8xf32>
    %19 = vector.shape_cast %18 : vector<8xf32> to vector<8x1xf32>
    %20 = math.log %19 : vector<8x1xf32>
    %21 = arith.addf %20, %14 : vector<8x1xf32>
    %22 = vector.broadcast %21 : vector<8x1xf32> to vector<8x16xf32>
    %23 = arith.subf %12, %22 : vector<8x16xf32>
    %c0_15 = arith.constant 0 : index
    %c0_16 = arith.constant 0 : index
    %24 = vector.load %arg7[%c0_15, %c0_16] : memref<16x512xf32, #tpu.memory_space<vmem>>, vector<16x512xf32>
    %cst_17 = arith.constant dense<0.000000e+00> : vector<8x512xf32>
    %25 = tpu.matmul %23, %24, %cst_17 {dimension_numbers = #tpu.dot_dimension_numbers<[1], [0], [0], [1], [0, 0, 1, 1], [], []>} : vector<8x16xf32>, vector<16x512xf32>, vector<8x512xf32> -> vector<8x512xf32>
    %26 = arith.mulf %0, %25 : vector<8x512xf32>
    %c0_18 = arith.constant 0 : index
    %c0_19 = arith.constant 0 : index
    %27 = vector.load %arg8[%c0_18, %c0_19] : memref<512x32xf32, #tpu.memory_space<vmem>>, vector<512x32xf32>
    %cst_20 = arith.constant dense<0.000000e+00> : vector<8x32xf32>
    %28 = tpu.matmul %26, %27, %cst_20 {dimension_numbers = #tpu.dot_dimension_numbers<[1], [0], [0], [1], [0, 0, 1, 1], [], []>} : vector<8x512xf32>, vector<512x32xf32>, vector<8x32xf32> -> vector<8x32xf32>
    %c0_21 = arith.constant 0 : index
    %c0_22 = arith.constant 0 : index
    %29 = vector.load %arg9[%c0_21, %c0_22] : memref<8x32xf32, #tpu.memory_space<vmem>>, vector<8x32xf32>
    tpu.vector_store %arg9[%c0_21, %c0_22], %28 {strides = array<i32>} : memref<8x32xf32, #tpu.memory_space<vmem>>, vector<8x32xf32>,
    return
  }
  func.func @transform_0(%arg0: i32) -> (i32, i32) {
    %c0_i32 = arith.constant 0 : i32
    %c0_i32_0 = arith.constant 0 : i32
    return %arg0, %c0_i32 : i32, i32
  }
  func.func @transform_1(%arg0: i32) -> (i32, i32) {
    %c0_i32 = arith.constant 0 : i32
    %c0_i32_0 = arith.constant 0 : i32
    return %arg0, %c0_i32 : i32, i32
  }
  func.func @transform_2(%arg0: i32) -> (i32, i32) {
    %c0_i32 = arith.constant 0 : i32
    %c0_i32_0 = arith.constant 0 : i32
    %c0_i32_1 = arith.constant 0 : i32
    return %c0_i32, %c0_i32_0 : i32, i32
  }
  func.func @transform_3(%arg0: i32) -> (i32, i32) {
    %c0_i32 = arith.constant 0 : i32
    %c0_i32_0 = arith.constant 0 : i32
    %c0_i32_1 = arith.constant 0 : i32
    return %c0_i32, %c0_i32_0 : i32, i32
  }
  func.func @transform_4(%arg0: i32) -> (i32, i32) {
    %c0_i32 = arith.constant 0 : i32
    %c0_i32_0 = arith.constant 0 : i32
    %c0_i32_1 = arith.constant 0 : i32
    return %c0_i32, %c0_i32_0 : i32, i32
  }
  func.func @transform_5(%arg0: i32) -> (i32, i32) {
    %c0_i32 = arith.constant 0 : i32
    %c0_i32_0 = arith.constant 0 : i32
    %c0_i32_1 = arith.constant 0 : i32
    return %c0_i32, %c0_i32_0 : i32, i32
  }
  func.func @transform_6(%arg0: i32) -> (i32, i32) {
    %c0_i32 = arith.constant 0 : i32
    %c0_i32_0 = arith.constant 0 : i32
    %c0_i32_1 = arith.constant 0 : i32
    return %c0_i32, %c0_i32_0 : i32, i32
  }
  func.func @transform_7(%arg0: i32) -> (i32, i32) {
    %c0_i32 = arith.constant 0 : i32
    %c0_i32_0 = arith.constant 0 : i32
    %c0_i32_1 = arith.constant 0 : i32
    return %c0_i32, %c0_i32_0 : i32, i32
  }
  func.func @transform_8(%arg0: i32) -> (i32, i32) {
    %c0_i32 = arith.constant 0 : i32
    %c0_i32_0 = arith.constant 0 : i32
    return %arg0, %c0_i32 : i32, i32
  }
}

</mosaic_0001>

<llo_original>
// kernel: tpu_custom_call.1
$region0: #{tpu_custom_call.1}
  #allocation0 [shape = 'u32[]', space=smem, size = 0x4, offset = 0x4, fixed_abs, tag = 'smem constant byte address 0x4 - core index']
  #allocation1 [shape = 'u32[72,128]{1,0:T(1,128)}', space=vmem, size = 0x9000, scoped, tag = 'internal scratch']
  %s0 = inlined_call_operand.vmem [shape: f32[8,512], index: 0, kind: input, shape index: {}]
  %s1 = inlined_call_operand.vmem [shape: f32[8,32], index: 1, kind: input, shape index: {}]
  %s2 = inlined_call_operand.hbm [shape: f32[512,512], index: 2, kind: input, shape index: {}]
  %s3 = inlined_call_operand.vmem [shape: f32[32,512], index: 3, kind: input, shape index: {}]
  %s4 = inlined_call_operand.vmem [shape: f32[1,512], index: 4, kind: input, shape index: {}]
  %s5 = inlined_call_operand.vmem [shape: f32[512,16], index: 5, kind: input, shape index: {}]
  %s6 = inlined_call_operand.vmem [shape: f32[16,512], index: 6, kind: input, shape index: {}]
  %s7 = inlined_call_operand.vmem [shape: f32[512,32], index: 7, kind: input, shape index: {}]
  %s8 = inlined_call_operand.hbm [shape: f32[8,32], index: 8, kind: output, shape index: {}]
  %s9 = sld [smem:[#allocation0]]
  $region46: #{tpu_custom_call.1} parent=0
    _
  %s11 = ssub.s32 1, %s9
  %s12 = scalar_select 0, %s11, %s9
  $region1: #{tpu_custom_call.1} parent=0
    #allocation2 [shape = 'u8[1048576]{0}', space=vmem, size = 0x100000, scoped, tag = 'input window, operand 2, single buffered']
    #allocation3 [shape = 's32[1]{0}', space=sflag, size = 0x4, scoped, tag = 'scoped memory for tpu_custom_call.1']
    #allocation4 [shape = 's32[1]{0}', space=sflag, size = 0x4, scoped, tag = 'scoped memory for tpu_custom_call.1']
    #allocation5 [shape = 'u8[4096]{0}', space=vmem, size = 0x1000, scoped, tag = 'output window, operand 0, single buffered']
    %13 = vsyncpa [#allocation3], 0
    %14 = vsyncpa [#allocation4], 0
    // Predicated region
    $region2: #{tpu_custom_call.1} parent=1 // pred_check
      _
    $region3: #{tpu_custom_call.1} parent=1 // pred_check_branch
      %16 = sbr.rel (0) target = $region5
    $region4: #{tpu_custom_call.1} parent=1 // pred_region
      _
    $region5: #{tpu_custom_call.1} parent=1 // pred_fallthru
      _
    // Predicated region
    $region6: #{tpu_custom_call.1} parent=1 // pred_check
      _
    $region7: #{tpu_custom_call.1} parent=1 // pred_check_branch
      %18 = sbr.rel (0) target = $region9
    $region8: #{tpu_custom_call.1} parent=1 // pred_region
      _
    $region9: #{tpu_custom_call.1} parent=1 // pred_fallthru
      _
    // Predicated region
    $region10: #{tpu_custom_call.1} parent=1 // pred_check
      _
    $region11: #{tpu_custom_call.1} parent=1 // pred_check_branch
      %20 = sbr.rel (0) target = $region13
    $region12: #{tpu_custom_call.1} parent=1 // pred_region
      %22 = vsyncadd [#allocation3], 0
      %s23 = sshll.u32 %s2, 4
      %s24 = int_to_ptr.hbm [resolvable:$true] %s23
      %s25 = sshll.u32 [#allocation2], 4
      %s26 = int_to_ptr.vmem [resolvable:$true] %s25
      %31 = dma.hbm_to_vmem [thread:$0]  %s24, 32768, %s26, [#allocation3], 512, 512, 32
    $region13: #{tpu_custom_call.1} parent=1 // pred_fallthru
      _
    // Predicated region
    $region14: #{tpu_custom_call.1} parent=1 // pred_check
      _
    $region15: #{tpu_custom_call.1} parent=1 // pred_check_branch
      %33 = sbr.rel (0) target = $region17
    $region16: #{tpu_custom_call.1} parent=1 // pred_region
      _
    $region17: #{tpu_custom_call.1} parent=1 // pred_fallthru
      _
    // Predicated region
    $region18: #{tpu_custom_call.1} parent=1 // pred_check
      _
    $region19: #{tpu_custom_call.1} parent=1 // pred_check_branch
      %35 = sbr.rel (0) target = $region21
    $region20: #{tpu_custom_call.1} parent=1 // pred_region
      _
    $region21: #{tpu_custom_call.1} parent=1 // pred_fallthru
      _
    // Predicated region
    $region22: #{tpu_custom_call.1} parent=1 // pred_check
      _
    $region23: #{tpu_custom_call.1} parent=1 // pred_check_branch
      %37 = sbr.rel (0) target = $region25
    $region24: #{tpu_custom_call.1} parent=1 // pred_region
      _
    $region25: #{tpu_custom_call.1} parent=1 // pred_fallthru
      _
    // Predicated region
    $region26: #{tpu_custom_call.1} parent=1 // pred_check
      _
    $region27: #{tpu_custom_call.1} parent=1 // pred_check_branch
      %39 = sbr.rel (0) target = $region29
    $region28: #{tpu_custom_call.1} parent=1 // pred_region
      _
    $region29: #{tpu_custom_call.1} parent=1 // pred_fallthru
      _
    // Predicated region
    $region30: #{tpu_custom_call.1} parent=1 // pred_check
      _
    $region31: #{tpu_custom_call.1} parent=1 // pred_check_branch
      %41 = sbr.rel (0) target = $region33
    $region32: #{tpu_custom_call.1} parent=1 // pred_region
      _
    $region33: #{tpu_custom_call.1} parent=1 // pred_fallthru
      _
    // Predicated region
    $region34: #{tpu_custom_call.1} parent=1 // pred_check
      _
    $region35: #{tpu_custom_call.1} parent=1 // pred_check_branch
      %43 = sbr.rel (0) target = $region37
    $region36: #{tpu_custom_call.1} parent=1 // pred_region
      %45 = dma.done [#allocation3], 32768
    $region37: #{tpu_custom_call.1} parent=1 // pred_fallthru
      _
    %v46 = vld [vmem:[%s0] sm:$0xff]
    %v47 = vld [vmem:[%s0 + $0x8] sm:$0xff]
    %v48 = vld [vmem:[%s0 + $0x10] sm:$0xff]
    %v49 = vld [vmem:[%s0 + $0x18] sm:$0xff]
    %v50 = vld [vmem:[#allocation2] sm:$0xff]
    %v51 = vld [vmem:[#allocation2 + $0x8] sm:$0xff]
    %v52 = vld [vmem:[#allocation2 + $0x10] sm:$0xff]
    %v53 = vld [vmem:[#allocation2 + $0x18] sm:$0xff]
    %v54 = vld [vmem:[#allocation2 + $0x20] sm:$0xff]
    %v55 = vld [vmem:[#allocation2 + $0x28] sm:$0xff]
    %v56 = vld [vmem:[#allocation2 + $0x30] sm:$0xff]
    %v57 = vld [vmem:[#allocation2 + $0x38] sm:$0xff]
    %v58 = vld [vmem:[#allocation2 + $0x40] sm:$0xff]
    %v59 = vld [vmem:[#allocation2 + $0x48] sm:$0xff]
    %v60 = vld [vmem:[#allocation2 + $0x50] sm:$0xff]
    %v61 = vld [vmem:[#allocation2 + $0x58] sm:$0xff]
    %v62 = vld [vmem:[#allocation2 + $0x60] sm:$0xff]
    %v63 = vld [vmem:[#allocation2 + $0x68] sm:$0xff]
    %v64 = vld [vmem:[#allocation2 + $0x70] sm:$0xff]
    %v65 = vld [vmem:[#allocation2 + $0x78] sm:$0xff]
    %v66 = vld [vmem:[#allocation2 + $0x80] sm:$0xff]
    %v67 = vld [vmem:[#allocation2 + $0x88] sm:$0xff]
    %v68 = vld [vmem:[#allocation2 + $0x90] sm:$0xff]
    %v69 = vld [vmem:[#allocation2 + $0x98] sm:$0xff]
    %v70 = vld [vmem:[#allocation2 + $0xa0] sm:$0xff]
    %v71 = vld [vmem:[#allocation2 + $0xa8] sm:$0xff]
    %v72 = vld [vmem:[#allocation2 + $0xb0] sm:$0xff]
    %v73 = vld [vmem:[#allocation2 + $0xb8] sm:$0xff]
    %v74 = vld [vmem:[#allocation2 + $0xc0] sm:$0xff]
    %v75 = vld [vmem:[#allocation2 + $0xc8] sm:$0xff]
    %v76 = vld [vmem:[#allocation2 + $0xd0] sm:$0xff]
    %v77 = vld [vmem:[#allocation2 + $0xd8] sm:$0xff]
    %v78 = vld [vmem:[#allocation2 + $0xe0] sm:$0xff]
    %v79 = vld [vmem:[#allocation2 + $0xe8] sm:$0xff]
    %v80 = vld [vmem:[#allocation2 + $0xf0] sm:$0xff]
    %v81 = vld [vmem:[#allocation2 + $0xf8] sm:$0xff]
    %v82 = vld [vmem:[#allocation2 + $0x100] sm:$0xff]
    %v83 = vld [vmem:[#allocation2 + $0x108] sm:$0xff]
    %v84 = vld [vmem:[#allocation2 + $0x110] sm:$0xff]
    %v85 = vld [vmem:[#allocation2 + $0x118] sm:$0xff]
    %v86 = vld [vmem:[#allocation2 + $0x120] sm:$0xff]
    %v87 = vld [vmem:[#allocation2 + $0x128] sm:$0xff]
    %v88 = vld [vmem:[#allocation2 + $0x130] sm:$0xff]
    %v89 = vld [vmem:[#allocation2 + $0x138] sm:$0xff]
    %v90 = vld [vmem:[#allocation2 + $0x140] sm:$0xff]
    %v91 = vld [vmem:[#allocation2 + $0x148] sm:$0xff]
    %v92 = vld [vmem:[#allocation2 + $0x150] sm:$0xff]
    %v93 = vld [vmem:[#allocation2 + $0x158] sm:$0xff]
    %v94 = vld [vmem:[#allocation2 + $0x160] sm:$0xff]
    %v95 = vld [vmem:[#allocation2 + $0x168] sm:$0xff]
    %v96 = vld [vmem:[#allocation2 + $0x170] sm:$0xff]
    %v97 = vld [vmem:[#allocation2 + $0x178] sm:$0xff]
    %v98 = vld [vmem:[#allocation2 + $0x180] sm:$0xff]
    %v99 = vld [vmem:[#allocation2 + $0x188] sm:$0xff]
    %v100 = vld [vmem:[#allocation2 + $0x190] sm:$0xff]
    %v101 = vld [vmem:[#allocation2 + $0x198] sm:$0xff]
    %v102 = vld [vmem:[#allocation2 + $0x1a0] sm:$0xff]
    %v103 = vld [vmem:[#allocation2 + $0x1a8] sm:$0xff]
    %v104 = vld [vmem:[#allocation2 + $0x1b0] sm:$0xff]
    %v105 = vld [vmem:[#allocation2 + $0x1b8] sm:$0xff]
    %v106 = vld [vmem:[#allocation2 + $0x1c0] sm:$0xff]
    %v107 = vld [vmem:[#allocation2 + $0x1c8] sm:$0xff]
    %v108 = vld [vmem:[#allocation2 + $0x1d0] sm:$0xff]
    %v109 = vld [vmem:[#allocation2 + $0x1d8] sm:$0xff]
    %v110 = vld [vmem:[#allocation2 + $0x1e0] sm:$0xff]
    %v111 = vld [vmem:[#allocation2 + $0x1e8] sm:$0xff]
    %v112 = vld [vmem:[#allocation2 + $0x1f0] sm:$0xff]
    %v113 = vld [vmem:[#allocation2 + $0x1f8] sm:$0xff]
    %v114 = vld [vmem:[#allocation2 + $0x200] sm:$0xff]
    %v115 = vld [vmem:[#allocation2 + $0x208] sm:$0xff]
    %v116 = vld [vmem:[#allocation2 + $0x210] sm:$0xff]
    %v117 = vld [vmem:[#allocation2 + $0x218] sm:$0xff]
    %v118 = vld [vmem:[#allocation2 + $0x220] sm:$0xff]
    %v119 = vld [vmem:[#allocation2 + $0x228] sm:$0xff]
    %v120 = vld [vmem:[#allocation2 + $0x230] sm:$0xff]
    %v121 = vld [vmem:[#allocation2 + $0x238] sm:$0xff]
    %v122 = vld [vmem:[#allocation2 + $0x240] sm:$0xff]
    %v123 = vld [vmem:[#allocation2 + $0x248] sm:$0xff]
    %v124 = vld [vmem:[#allocation2 + $0x250] sm:$0xff]
    %v125 = vld [vmem:[#allocation2 + $0x258] sm:$0xff]
    %v126 = vld [vmem:[#allocation2 + $0x260] sm:$0xff]
    %v127 = vld [vmem:[#allocation2 + $0x268] sm:$0xff]
    %v128 = vld [vmem:[#allocation2 + $0x270] sm:$0xff]
    %v129 = vld [vmem:[#allocation2 + $0x278] sm:$0xff]
    %v130 = vld [vmem:[#allocation2 + $0x280] sm:$0xff]
    %v131 = vld [vmem:[#allocation2 + $0x288] sm:$0xff]
    %v132 = vld [vmem:[#allocation2 + $0x290] sm:$0xff]
    %v133 = vld [vmem:[#allocation2 + $0x298] sm:$0xff]
    %v134 = vld [vmem:[#allocation2 + $0x2a0] sm:$0xff]
    %v135 = vld [vmem:[#allocation2 + $0x2a8] sm:$0xff]
    %v136 = vld [vmem:[#allocation2 + $0x2b0] sm:$0xff]
    %v137 = vld [vmem:[#allocation2 + $0x2b8] sm:$0xff]
    %v138 = vld [vmem:[#allocation2 + $0x2c0] sm:$0xff]
    %v139 = vld [vmem:[#allocation2 + $0x2c8] sm:$0xff]
    %v140 = vld [vmem:[#allocation2 + $0x2d0] sm:$0xff]
    %v141 = vld [vmem:[#allocation2 + $0x2d8] sm:$0xff]
    %v142 = vld [vmem:[#allocation2 + $0x2e0] sm:$0xff]
    %v143 = vld [vmem:[#allocation2 + $0x2e8] sm:$0xff]
    %v144 = vld [vmem:[#allocation2 + $0x2f0] sm:$0xff]
    %v145 = vld [vmem:[#allocation2 + $0x2f8] sm:$0xff]
    %v146 = vld [vmem:[#allocation2 + $0x300] sm:$0xff]
    %v147 = vld [vmem:[#allocation2 + $0x308] sm:$0xff]
    %v148 = vld [vmem:[#allocation2 + $0x310] sm:$0xff]
    %v149 = vld [vmem:[#allocation2 + $0x318] sm:$0xff]
    %v150 = vld [vmem:[#allocation2 + $0x320] sm:$0xff]
    %v151 = vld [vmem:[#allocation2 + $0x328] sm:$0xff]
    %v152 = vld [vmem:[#allocation2 + $0x330] sm:$0xff]
    %v153 = vld [vmem:[#allocation2 + $0x338] sm:$0xff]
    %v154 = vld [vmem:[#allocation2 + $0x340] sm:$0xff]
    %v155 = vld [vmem:[#allocation2 + $0x348] sm:$0xff]
    %v156 = vld [vmem:[#allocation2 + $0x350] sm:$0xff]
    %v157 = vld [vmem:[#allocation2 + $0x358] sm:$0xff]
    %v158 = vld [vmem:[#allocation2 + $0x360] sm:$0xff]
    %v159 = vld [vmem:[#allocation2 + $0x368] sm:$0xff]
    %v160 = vld [vmem:[#allocation2 + $0x370] sm:$0xff]
    %v161 = vld [vmem:[#allocation2 + $0x378] sm:$0xff]
    %v162 = vld [vmem:[#allocation2 + $0x380] sm:$0xff]
    %v163 = vld [vmem:[#allocation2 + $0x388] sm:$0xff]
    %v164 = vld [vmem:[#allocation2 + $0x390] sm:$0xff]
    %v165 = vld [vmem:[#allocation2 + $0x398] sm:$0xff]
    %v166 = vld [vmem:[#allocation2 + $0x3a0] sm:$0xff]
    %v167 = vld [vmem:[#allocation2 + $0x3a8] sm:$0xff]
    %v168 = vld [vmem:[#allocation2 + $0x3b0] sm:$0xff]
    %v169 = vld [vmem:[#allocation2 + $0x3b8] sm:$0xff]
    %v170 = vld [vmem:[#allocation2 + $0x3c0] sm:$0xff]
    %v171 = vld [vmem:[#allocation2 + $0x3c8] sm:$0xff]
    %v172 = vld [vmem:[#allocation2 + $0x3d0] sm:$0xff]
    %v173 = vld [vmem:[#allocation2 + $0x3d8] sm:$0xff]
    %v174 = vld [vmem:[#allocation2 + $0x3e0] sm:$0xff]
    %v175 = vld [vmem:[#allocation2 + $0x3e8] sm:$0xff]
    %v176 = vld [vmem:[#allocation2 + $0x3f0] sm:$0xff]
    %v177 = vld [vmem:[#allocation2 + $0x3f8] sm:$0xff]
    %v178 = vld [vmem:[#allocation2 + $0x400] sm:$0xff]
    %v179 = vld [vmem:[#allocation2 + $0x408] sm:$0xff]
    %v180 = vld [vmem:[#allocation2 + $0x410] sm:$0xff]
    %v181 = vld [vmem:[#allocation2 + $0x418] sm:$0xff]
    %v182 = vld [vmem:[#allocation2 + $0x420] sm:$0xff]
    %v183 = vld [vmem:[#allocation2 + $0x428] sm:$0xff]
    %v184 = vld [vmem:[#allocation2 + $0x430] sm:$0xff]
    %v185 = vld [vmem:[#allocation2 + $0x438] sm:$0xff]
    %v186 = vld [vmem:[#allocation2 + $0x440] sm:$0xff]
    %v187 = vld [vmem:[#allocation2 + $0x448] sm:$0xff]
    %v188 = vld [vmem:[#allocation2 + $0x450] sm:$0xff]
    %v189 = vld [vmem:[#allocation2 + $0x458] sm:$0xff]
    %v190 = vld [vmem:[#allocation2 + $0x460] sm:$0xff]
    %v191 = vld [vmem:[#allocation2 + $0x468] sm:$0xff]
    %v192 = vld [vmem:[#allocation2 + $0x470] sm:$0xff]
    %v193 = vld [vmem:[#allocation2 + $0x478] sm:$0xff]
    %v194 = vld [vmem:[#allocation2 + $0x480] sm:$0xff]
    %v195 = vld [vmem:[#allocation2 + $0x488] sm:$0xff]
    %v196 = vld [vmem:[#allocation2 + $0x490] sm:$0xff]
    %v197 = vld [vmem:[#allocation2 + $0x498] sm:$0xff]
    %v198 = vld [vmem:[#allocation2 + $0x4a0] sm:$0xff]
    %v199 = vld [vmem:[#allocation2 + $0x4a8] sm:$0xff]
    %v200 = vld [vmem:[#allocation2 + $0x4b0] sm:$0xff]
    %v201 = vld [vmem:[#allocation2 + $0x4b8] sm:$0xff]
    %v202 = vld [vmem:[#allocation2 + $0x4c0] sm:$0xff]
    %v203 = vld [vmem:[#allocation2 + $0x4c8] sm:$0xff]
    %v204 = vld [vmem:[#allocation2 + $0x4d0] sm:$0xff]
    %v205 = vld [vmem:[#allocation2 + $0x4d8] sm:$0xff]
    %v206 = vld [vmem:[#allocation2 + $0x4e0] sm:$0xff]
    %v207 = vld [vmem:[#allocation2 + $0x4e8] sm:$0xff]
    %v208 = vld [vmem:[#allocation2 + $0x4f0] sm:$0xff]
    %v209 = vld [vmem:[#allocation2 + $0x4f8] sm:$0xff]
    %v210 = vld [vmem:[#allocation2 + $0x500] sm:$0xff]
    %v211 = vld [vmem:[#allocation2 + $0x508] sm:$0xff]
    %v212 = vld [vmem:[#allocation2 + $0x510] sm:$0xff]
    %v213 = vld [vmem:[#allocation2 + $0x518] sm:$0xff]
    %v214 = vld [vmem:[#allocation2 + $0x520] sm:$0xff]
    %v215 = vld [vmem:[#allocation2 + $0x528] sm:$0xff]
    %v216 = vld [vmem:[#allocation2 + $0x530] sm:$0xff]
    %v217 = vld [vmem:[#allocation2 + $0x538] sm:$0xff]
    %v218 = vld [vmem:[#allocation2 + $0x540] sm:$0xff]
    %v219 = vld [vmem:[#allocation2 + $0x548] sm:$0xff]
    %v220 = vld [vmem:[#allocation2 + $0x550] sm:$0xff]
    %v221 = vld [vmem:[#allocation2 + $0x558] sm:$0xff]
    %v222 = vld [vmem:[#allocation2 + $0x560] sm:$0xff]
    %v223 = vld [vmem:[#allocation2 + $0x568] sm:$0xff]
    %v224 = vld [vmem:[#allocation2 + $0x570] sm:$0xff]
    %v225 = vld [vmem:[#allocation2 + $0x578] sm:$0xff]
    %v226 = vld [vmem:[#allocation2 + $0x580] sm:$0xff]
    %v227 = vld [vmem:[#allocation2 + $0x588] sm:$0xff]
    %v228 = vld [vmem:[#allocation2 + $0x590] sm:$0xff]
    %v229 = vld [vmem:[#allocation2 + $0x598] sm:$0xff]
    %v230 = vld [vmem:[#allocation2 + $0x5a0] sm:$0xff]
    %v231 = vld [vmem:[#allocation2 + $0x5a8] sm:$0xff]
    %v232 = vld [vmem:[#allocation2 + $0x5b0] sm:$0xff]
    %v233 = vld [vmem:[#allocation2 + $0x5b8] sm:$0xff]
    %v234 = vld [vmem:[#allocation2 + $0x5c0] sm:$0xff]
    %v235 = vld [vmem:[#allocation2 + $0x5c8] sm:$0xff]
    %v236 = vld [vmem:[#allocation2 + $0x5d0] sm:$0xff]
    %v237 = vld [vmem:[#allocation2 + $0x5d8] sm:$0xff]
    %v238 = vld [vmem:[#allocation2 + $0x5e0] sm:$0xff]
    %v239 = vld [vmem:[#allocation2 + $0x5e8] sm:$0xff]
    %v240 = vld [vmem:[#allocation2 + $0x5f0] sm:$0xff]
    %v241 = vld [vmem:[#allocation2 + $0x5f8] sm:$0xff]
    %v242 = vld [vmem:[#allocation2 + $0x600] sm:$0xff]
    %v243 = vld [vmem:[#allocation2 + $0x608] sm:$0xff]
    %v244 = vld [vmem:[#allocation2 + $0x610] sm:$0xff]
    %v245 = vld [vmem:[#allocation2 + $0x618] sm:$0xff]
    %v246 = vld [vmem:[#allocation2 + $0x620] sm:$0xff]
    %v247 = vld [vmem:[#allocation2 + $0x628] sm:$0xff]
    %v248 = vld [vmem:[#allocation2 + $0x630] sm:$0xff]
    %v249 = vld [vmem:[#allocation2 + $0x638] sm:$0xff]
    %v250 = vld [vmem:[#allocation2 + $0x640] sm:$0xff]
    %v251 = vld [vmem:[#allocation2 + $0x648] sm:$0xff]
    %v252 = vld [vmem:[#allocation2 + $0x650] sm:$0xff]
    %v253 = vld [vmem:[#allocation2 + $0x658] sm:$0xff]
    %v254 = vld [vmem:[#allocation2 + $0x660] sm:$0xff]
    %v255 = vld [vmem:[#allocation2 + $0x668] sm:$0xff]
    %v256 = vld [vmem:[#allocation2 + $0x670] sm:$0xff]
    %v257 = vld [vmem:[#allocation2 + $0x678] sm:$0xff]
    %v258 = vld [vmem:[#allocation2 + $0x680] sm:$0xff]
    %v259 = vld [vmem:[#allocation2 + $0x688] sm:$0xff]
    %v260 = vld [vmem:[#allocation2 + $0x690] sm:$0xff]
    %v261 = vld [vmem:[#allocation2 + $0x698] sm:$0xff]
    %v262 = vld [vmem:[#allocation2 + $0x6a0] sm:$0xff]
    %v263 = vld [vmem:[#allocation2 + $0x6a8] sm:$0xff]
    %v264 = vld [vmem:[#allocation2 + $0x6b0] sm:$0xff]
    %v265 = vld [vmem:[#allocation2 + $0x6b8] sm:$0xff]
    %v266 = vld [vmem:[#allocation2 + $0x6c0] sm:$0xff]
    %v267 = vld [vmem:[#allocation2 + $0x6c8] sm:$0xff]
    %v268 = vld [vmem:[#allocation2 + $0x6d0] sm:$0xff]
    %v269 = vld [vmem:[#allocation2 + $0x6d8] sm:$0xff]
    %v270 = vld [vmem:[#allocation2 + $0x6e0] sm:$0xff]
    %v271 = vld [vmem:[#allocation2 + $0x6e8] sm:$0xff]
    %v272 = vld [vmem:[#allocation2 + $0x6f0] sm:$0xff]
    %v273 = vld [vmem:[#allocation2 + $0x6f8] sm:$0xff]
    %v274 = vld [vmem:[#allocation2 + $0x700] sm:$0xff]
    %v275 = vld [vmem:[#allocation2 + $0x708] sm:$0xff]
    %v276 = vld [vmem:[#allocation2 + $0x710] sm:$0xff]
    %v277 = vld [vmem:[#allocation2 + $0x718] sm:$0xff]
    %v278 = vld [vmem:[#allocation2 + $0x720] sm:$0xff]
    %v279 = vld [vmem:[#allocation2 + $0x728] sm:$0xff]
    %v280 = vld [vmem:[#allocation2 + $0x730] sm:$0xff]
    %v281 = vld [vmem:[#allocation2 + $0x738] sm:$0xff]
    %v282 = vld [vmem:[#allocation2 + $0x740] sm:$0xff]
    %v283 = vld [vmem:[#allocation2 + $0x748] sm:$0xff]
    %v284 = vld [vmem:[#allocation2 + $0x750] sm:$0xff]
    %v285 = vld [vmem:[#allocation2 + $0x758] sm:$0xff]
    %v286 = vld [vmem:[#allocation2 + $0x760] sm:$0xff]
    %v287 = vld [vmem:[#allocation2 + $0x768] sm:$0xff]
    %v288 = vld [vmem:[#allocation2 + $0x770] sm:$0xff]
    %v289 = vld [vmem:[#allocation2 + $0x778] sm:$0xff]
    %v290 = vld [vmem:[#allocation2 + $0x780] sm:$0xff]
    %v291 = vld [vmem:[#allocation2 + $0x788] sm:$0xff]
    %v292 = vld [vmem:[#allocation2 + $0x790] sm:$0xff]
    %v293 = vld [vmem:[#allocation2 + $0x798] sm:$0xff]
    %v294 = vld [vmem:[#allocation2 + $0x7a0] sm:$0xff]
    %v295 = vld [vmem:[#allocation2 + $0x7a8] sm:$0xff]
    %v296 = vld [vmem:[#allocation2 + $0x7b0] sm:$0xff]
    %v297 = vld [vmem:[#allocation2 + $0x7b8] sm:$0xff]
    %v298 = vld [vmem:[#allocation2 + $0x7c0] sm:$0xff]
    %v299 = vld [vmem:[#allocation2 + $0x7c8] sm:$0xff]
    %v300 = vld [vmem:[#allocation2 + $0x7d0] sm:$0xff]
    %v301 = vld [vmem:[#allocation2 + $0x7d8] sm:$0xff]
    %v302 = vld [vmem:[#allocation2 + $0x7e0] sm:$0xff]
    %v303 = vld [vmem:[#allocation2 + $0x7e8] sm:$0xff]
    %v304 = vld [vmem:[#allocation2 + $0x7f0] sm:$0xff]
    %v305 = vld [vmem:[#allocation2 + $0x7f8] sm:$0xff]
    %v306 = vld [vmem:[%s1] sm:$0xff]
    %v307 = vld [vmem:[%s3] sm:$0xff]
    %v308 = vld [vmem:[%s3 + $0x8] sm:$0xff]
    %v309 = vld [vmem:[%s3 + $0x10] sm:$0xff]
    %v310 = vld [vmem:[%s3 + $0x18] sm:$0xff]
    %v311 = vld [vmem:[%s3 + $0x20] sm:$0xff]
    %v312 = vld [vmem:[%s3 + $0x28] sm:$0xff]
    %v313 = vld [vmem:[%s3 + $0x30] sm:$0xff]
    %v314 = vld [vmem:[%s3 + $0x38] sm:$0xff]
    %v315 = vld [vmem:[%s3 + $0x40] sm:$0xff]
    %v316 = vld [vmem:[%s3 + $0x48] sm:$0xff]
    %v317 = vld [vmem:[%s3 + $0x50] sm:$0xff]
    %v318 = vld [vmem:[%s3 + $0x58] sm:$0xff]
    %v319 = vld [vmem:[%s3 + $0x60] sm:$0xff]
    %v320 = vld [vmem:[%s3 + $0x68] sm:$0xff]
    %v321 = vld [vmem:[%s3 + $0x70] sm:$0xff]
    %v322 = vld [vmem:[%s3 + $0x78] sm:$0xff]
    %vm323 = vcmask 261120
    %v325 = vsel %vm323, %v306, 0
    %327 = vmatpush.msra.mxu0 0.0
    %328 = vmatpush.msra.mxu0 0.0
    %329 = vmatpush.msra.mxu0 0.0
    %330 = vmatpush.msra.mxu0 0.0
    %331 = vmatpush.msra.mxu0 0.0
    %332 = vmatpush.msra.mxu0 0.0
    %333 = vmatpush.msra.mxu0 0.0
    %334 = vmatpush.msra.mxu0 0.0
    %335 = vmatpush.msra.mxu0 0.0
    %336 = vmatpush.msra.mxu0 0.0
    %337 = vmatpush.msra.mxu0 0.0
    %338 = vmatpush.msra.mxu0 0.0
    %339 = vmatpush.msra.mxu0 %v319
    %340 = vmatpush.msra.mxu0 %v315
    %341 = vmatpush.msra.mxu0 %v311
    %342 = vmatpush.msra.mxu0 %v307
    %343 = vmatmul.f32.gmra.mxu0 %v325
    %v344 = vpop.f32.mrf.mxu0
    %v345 = vadd.f32 0.0, %v344
    %346 = vdwg.mxu0
    %347 = vmatpush.msra.mxu0 0.0
    %348 = vmatpush.msra.mxu0 0.0
    %349 = vmatpush.msra.mxu0 0.0
    %350 = vmatpush.msra.mxu0 0.0
    %351 = vmatpush.msra.mxu0 0.0
    %352 = vmatpush.msra.mxu0 0.0
    %353 = vmatpush.msra.mxu0 0.0
    %354 = vmatpush.msra.mxu0 0.0
    %355 = vmatpush.msra.mxu0 0.0
    %356 = vmatpush.msra.mxu0 0.0
    %357 = vmatpush.msra.mxu0 0.0
    %358 = vmatpush.msra.mxu0 0.0
    %359 = vmatpush.msra.mxu0 %v320
    %360 = vmatpush.msra.mxu0 %v316
    %361 = vmatpush.msra.mxu0 %v312
    %362 = vmatpush.msra.mxu0 %v308
    %363 = vmatmul.f32.gmra.mxu0 %v325
    %v364 = vpop.f32.mrf.mxu0
    %v365 = vadd.f32 0.0, %v364
    %366 = vdwg.mxu0
    %367 = vmatpush.msra.mxu0 0.0
    %368 = vmatpush.msra.mxu0 0.0
    %369 = vmatpush.msra.mxu0 0.0
    %370 = vmatpush.msra.mxu0 0.0
    %371 = vmatpush.msra.mxu0 0.0
    %372 = vmatpush.msra.mxu0 0.0
    %373 = vmatpush.msra.mxu0 0.0
    %374 = vmatpush.msra.mxu0 0.0
    %375 = vmatpush.msra.mxu0 0.0
    %376 = vmatpush.msra.mxu0 0.0
    %377 = vmatpush.msra.mxu0 0.0
    %378 = vmatpush.msra.mxu0 0.0
    %379 = vmatpush.msra.mxu0 %v321
    %380 = vmatpush.msra.mxu0 %v317
    %381 = vmatpush.msra.mxu0 %v313
    %382 = vmatpush.msra.mxu0 %v309
    %383 = vmatmul.f32.gmra.mxu0 %v325
    %v384 = vpop.f32.mrf.mxu0
    %v385 = vadd.f32 0.0, %v384
    %386 = vdwg.mxu0
    %387 = vmatpush.msra.mxu0 0.0
    %388 = vmatpush.msra.mxu0 0.0
    %389 = vmatpush.msra.mxu0 0.0
    %390 = vmatpush.msra.mxu0 0.0
    %391 = vmatpush.msra.mxu0 0.0
    %392 = vmatpush.msra.mxu0 0.0
    %393 = vmatpush.msra.mxu0 0.0
    %394 = vmatpush.msra.mxu0 0.0
    %395 = vmatpush.msra.mxu0 0.0
    %396 = vmatpush.msra.mxu0 0.0
    %397 = vmatpush.msra.mxu0 0.0
    %398 = vmatpush.msra.mxu0 0.0
    %399 = vmatpush.msra.mxu0 %v322
    %400 = vmatpush.msra.mxu0 %v318
    %401 = vmatpush.msra.mxu0 %v314
    %402 = vmatpush.msra.mxu0 %v310
    %403 = vmatmul.f32.gmra.mxu0 %v325
    %v404 = vpop.f32.mrf.mxu0
    %v405 = vadd.f32 0.0, %v404
    %406 = vdwg.mxu0
    %407 = vmatpush.msra.mxu0 %v110
    %408 = vmatpush.msra.mxu0 %v106
    %409 = vmatpush.msra.mxu0 %v102
    %410 = vmatpush.msra.mxu0 %v98
    %411 = vmatpush.msra.mxu0 %v94
    %412 = vmatpush.msra.mxu0 %v90
    %413 = vmatpush.msra.mxu0 %v86
    %414 = vmatpush.msra.mxu0 %v82
    %415 = vmatpush.msra.mxu0 %v78
    %416 = vmatpush.msra.mxu0 %v74
    %417 = vmatpush.msra.mxu0 %v70
    %418 = vmatpush.msra.mxu0 %v66
    %419 = vmatpush.msra.mxu0 %v62
    %420 = vmatpush.msra.mxu0 %v58
    %421 = vmatpush.msra.mxu0 %v54
    %422 = vmatpush.msra.mxu0 %v50
    %423 = vmatmul.f32.gmra.mxu0 %v46
    %v424 = vpop.f32.mrf.mxu0
    %v425 = vadd.f32 %v345, %v424
    %426 = vdwg.mxu0
    %427 = vmatpush.msra.mxu0 %v174
    %428 = vmatpush.msra.mxu0 %v170
    %429 = vmatpush.msra.mxu0 %v166
    %430 = vmatpush.msra.mxu0 %v162
    %431 = vmatpush.msra.mxu0 %v158
    %432 = vmatpush.msra.mxu0 %v154
    %433 = vmatpush.msra.mxu0 %v150
    %434 = vmatpush.msra.mxu0 %v146
    %435 = vmatpush.msra.mxu0 %v142
    %436 = vmatpush.msra.mxu0 %v138
    %437 = vmatpush.msra.mxu0 %v134
    %438 = vmatpush.msra.mxu0 %v130
    %439 = vmatpush.msra.mxu0 %v126
    %440 = vmatpush.msra.mxu0 %v122
    %441 = vmatpush.msra.mxu0 %v118
    %442 = vmatpush.msra.mxu0 %v114
    %443 = vmatmul.f32.gmra.mxu0 %v47
    %v444 = vpop.f32.mrf.mxu0
    %v445 = vadd.f32 %v425, %v444
    %446 = vdwg.mxu0
    %447 = vmatpush.msra.mxu0 %v238
    %448 = vmatpush.msra.mxu0 %v234
    %449 = vmatpush.msra.mxu0 %v230
    %450 = vmatpush.msra.mxu0 %v226
    %451 = vmatpush.msra.mxu0 %v222
    %452 = vmatpush.msra.mxu0 %v218
    %453 = vmatpush.msra.mxu0 %v214
    %454 = vmatpush.msra.mxu0 %v210
    %455 = vmatpush.msra.mxu0 %v206
    %456 = vmatpush.msra.mxu0 %v202
    %457 = vmatpush.msra.mxu0 %v198
    %458 = vmatpush.msra.mxu0 %v194
    %459 = vmatpush.msra.mxu0 %v190
    %460 = vmatpush.msra.mxu0 %v186
    %461 = vmatpush.msra.mxu0 %v182
    %462 = vmatpush.msra.mxu0 %v178
    %463 = vmatmul.f32.gmra.mxu0 %v48
    %v464 = vpop.f32.mrf.mxu0
    %v465 = vadd.f32 %v445, %v464
    %466 = vdwg.mxu0
    %467 = vmatpush.msra.mxu0 %v302
    %468 = vmatpush.msra.mxu0 %v298
    %469 = vmatpush.msra.mxu0 %v294
    %470 = vmatpush.msra.mxu0 %v290
    %471 = vmatpush.msra.mxu0 %v286
    %472 = vmatpush.msra.mxu0 %v282
    %473 = vmatpush.msra.mxu0 %v278
    %474 = vmatpush.msra.mxu0 %v274
    %475 = vmatpush.msra.mxu0 %v270
    %476 = vmatpush.msra.mxu0 %v266
    %477 = vmatpush.msra.mxu0 %v262
    %478 = vmatpush.msra.mxu0 %v258
    %479 = vmatpush.msra.mxu0 %v254
    %480 = vmatpush.msra.mxu0 %v250
    %481 = vmatpush.msra.mxu0 %v246
    %482 = vmatpush.msra.mxu0 %v242
    %483 = vmatmul.f32.gmra.mxu0 %v49
    %v484 = vpop.f32.mrf.mxu0
    %v485 = vadd.f32 %v465, %v484
    %486 = vdwg.mxu0
    %487 = vmatpush.msra.mxu0 %v111
    %488 = vmatpush.msra.mxu0 %v107
    %489 = vmatpush.msra.mxu0 %v103
    %490 = vmatpush.msra.mxu0 %v99
    %491 = vmatpush.msra.mxu0 %v95
    %492 = vmatpush.msra.mxu0 %v91
    %493 = vmatpush.msra.mxu0 %v87
    %494 = vmatpush.msra.mxu0 %v83
    %495 = vmatpush.msra.mxu0 %v79
    %496 = vmatpush.msra.mxu0 %v75
    %497 = vmatpush.msra.mxu0 %v71
    %498 = vmatpush.msra.mxu0 %v67
    %499 = vmatpush.msra.mxu0 %v63
    %500 = vmatpush.msra.mxu0 %v59
    %501 = vmatpush.msra.mxu0 %v55
    %502 = vmatpush.msra.mxu0 %v51
    %503 = vmatmul.f32.gmra.mxu0 %v46
    %v504 = vpop.f32.mrf.mxu0
    %v505 = vadd.f32 %v365, %v504
    %506 = vdwg.mxu0
    %507 = vmatpush.msra.mxu0 %v175
    %508 = vmatpush.msra.mxu0 %v171
    %509 = vmatpush.msra.mxu0 %v167
    %510 = vmatpush.msra.mxu0 %v163
    %511 = vmatpush.msra.mxu0 %v159
    %512 = vmatpush.msra.mxu0 %v155
    %513 = vmatpush.msra.mxu0 %v151
    %514 = vmatpush.msra.mxu0 %v147
    %515 = vmatpush.msra.mxu0 %v143
    %516 = vmatpush.msra.mxu0 %v139
    %517 = vmatpush.msra.mxu0 %v135
    %518 = vmatpush.msra.mxu0 %v131
    %519 = vmatpush.msra.mxu0 %v127
    %520 = vmatpush.msra.mxu0 %v123
    %521 = vmatpush.msra.mxu0 %v119
    %522 = vmatpush.msra.mxu0 %v115
    %523 = vmatmul.f32.gmra.mxu0 %v47
    %v524 = vpop.f32.mrf.mxu0
    %v525 = vadd.f32 %v505, %v524
    %526 = vdwg.mxu0
    %527 = vmatpush.msra.mxu0 %v239
    %528 = vmatpush.msra.mxu0 %v235
    %529 = vmatpush.msra.mxu0 %v231
    %530 = vmatpush.msra.mxu0 %v227
    %531 = vmatpush.msra.mxu0 %v223
    %532 = vmatpush.msra.mxu0 %v219
    %533 = vmatpush.msra.mxu0 %v215
    %534 = vmatpush.msra.mxu0 %v211
    %535 = vmatpush.msra.mxu0 %v207
    %536 = vmatpush.msra.mxu0 %v203
    %537 = vmatpush.msra.mxu0 %v199
    %538 = vmatpush.msra.mxu0 %v195
    %539 = vmatpush.msra.mxu0 %v191
    %540 = vmatpush.msra.mxu0 %v187
    %541 = vmatpush.msra.mxu0 %v183
    %542 = vmatpush.msra.mxu0 %v179
    %543 = vmatmul.f32.gmra.mxu0 %v48
    %v544 = vpop.f32.mrf.mxu0
    %v545 = vadd.f32 %v525, %v544
    %546 = vdwg.mxu0
    %547 = vmatpush.msra.mxu0 %v303
    %548 = vmatpush.msra.mxu0 %v299
    %549 = vmatpush.msra.mxu0 %v295
    %550 = vmatpush.msra.mxu0 %v291
    %551 = vmatpush.msra.mxu0 %v287
    %552 = vmatpush.msra.mxu0 %v283
    %553 = vmatpush.msra.mxu0 %v279
    %554 = vmatpush.msra.mxu0 %v275
    %555 = vmatpush.msra.mxu0 %v271
    %556 = vmatpush.msra.mxu0 %v267
    %557 = vmatpush.msra.mxu0 %v263
    %558 = vmatpush.msra.mxu0 %v259
    %559 = vmatpush.msra.mxu0 %v255
    %560 = vmatpush.msra.mxu0 %v251
    %561 = vmatpush.msra.mxu0 %v247
    %562 = vmatpush.msra.mxu0 %v243
    %563 = vmatmul.f32.gmra.mxu0 %v49
    %v564 = vpop.f32.mrf.mxu0
    %v565 = vadd.f32 %v545, %v564
    %566 = vdwg.mxu0
    %567 = vmatpush.msra.mxu0 %v112
    %568 = vmatpush.msra.mxu0 %v108
    %569 = vmatpush.msra.mxu0 %v104
    %570 = vmatpush.msra.mxu0 %v100
    %571 = vmatpush.msra.mxu0 %v96
    %572 = vmatpush.msra.mxu0 %v92
    %573 = vmatpush.msra.mxu0 %v88
    %574 = vmatpush.msra.mxu0 %v84
    %575 = vmatpush.msra.mxu0 %v80
    %576 = vmatpush.msra.mxu0 %v76
    %577 = vmatpush.msra.mxu0 %v72
    %578 = vmatpush.msra.mxu0 %v68
    %579 = vmatpush.msra.mxu0 %v64
    %580 = vmatpush.msra.mxu0 %v60
    %581 = vmatpush.msra.mxu0 %v56
    %582 = vmatpush.msra.mxu0 %v52
    %583 = vmatmul.f32.gmra.mxu0 %v46
    %v584 = vpop.f32.mrf.mxu0
    %v585 = vadd.f32 %v385, %v584
    %586 = vdwg.mxu0
    %587 = vmatpush.msra.mxu0 %v176
    %588 = vmatpush.msra.mxu0 %v172
    %589 = vmatpush.msra.mxu0 %v168
    %590 = vmatpush.msra.mxu0 %v164
    %591 = vmatpush.msra.mxu0 %v160
    %592 = vmatpush.msra.mxu0 %v156
    %593 = vmatpush.msra.mxu0 %v152
    %594 = vmatpush.msra.mxu0 %v148
    %595 = vmatpush.msra.mxu0 %v144
    %596 = vmatpush.msra.mxu0 %v140
    %597 = vmatpush.msra.mxu0 %v136
    %598 = vmatpush.msra.mxu0 %v132
    %599 = vmatpush.msra.mxu0 %v128
    %600 = vmatpush.msra.mxu0 %v124
    %601 = vmatpush.msra.mxu0 %v120
    %602 = vmatpush.msra.mxu0 %v116
    %603 = vmatmul.f32.gmra.mxu0 %v47
    %v604 = vpop.f32.mrf.mxu0
    %v605 = vadd.f32 %v585, %v604
    %606 = vdwg.mxu0
    %607 = vmatpush.msra.mxu0 %v240
    %608 = vmatpush.msra.mxu0 %v236
    %609 = vmatpush.msra.mxu0 %v232
    %610 = vmatpush.msra.mxu0 %v228
    %611 = vmatpush.msra.mxu0 %v224
    %612 = vmatpush.msra.mxu0 %v220
    %613 = vmatpush.msra.mxu0 %v216
    %614 = vmatpush.msra.mxu0 %v212
    %615 = vmatpush.msra.mxu0 %v208
    %616 = vmatpush.msra.mxu0 %v204
    %617 = vmatpush.msra.mxu0 %v200
    %618 = vmatpush.msra.mxu0 %v196
    %619 = vmatpush.msra.mxu0 %v192
    %620 = vmatpush.msra.mxu0 %v188
    %621 = vmatpush.msra.mxu0 %v184
    %622 = vmatpush.msra.mxu0 %v180
    %623 = vmatmul.f32.gmra.mxu0 %v48
    %v624 = vpop.f32.mrf.mxu0
    %v625 = vadd.f32 %v605, %v624
    %626 = vdwg.mxu0
    %627 = vmatpush.msra.mxu0 %v304
    %628 = vmatpush.msra.mxu0 %v300
    %629 = vmatpush.msra.mxu0 %v296
    %630 = vmatpush.msra.mxu0 %v292
    %631 = vmatpush.msra.mxu0 %v288
    %632 = vmatpush.msra.mxu0 %v284
    %633 = vmatpush.msra.mxu0 %v280
    %634 = vmatpush.msra.mxu0 %v276
    %635 = vmatpush.msra.mxu0 %v272
    %636 = vmatpush.msra.mxu0 %v268
    %637 = vmatpush.msra.mxu0 %v264
    %638 = vmatpush.msra.mxu0 %v260
    %639 = vmatpush.msra.mxu0 %v256
    %640 = vmatpush.msra.mxu0 %v252
    %641 = vmatpush.msra.mxu0 %v248
    %642 = vmatpush.msra.mxu0 %v244
    %643 = vmatmul.f32.gmra.mxu0 %v49
    %v644 = vpop.f32.mrf.mxu0
    %v645 = vadd.f32 %v625, %v644
    %646 = vdwg.mxu0
    %647 = vmatpush.msra.mxu0 %v113
    %648 = vmatpush.msra.mxu0 %v109
    %649 = vmatpush.msra.mxu0 %v105
    %650 = vmatpush.msra.mxu0 %v101
    %651 = vmatpush.msra.mxu0 %v97
    %652 = vmatpush.msra.mxu0 %v93
    %653 = vmatpush.msra.mxu0 %v89
    %654 = vmatpush.msra.mxu0 %v85
    %655 = vmatpush.msra.mxu0 %v81
    %656 = vmatpush.msra.mxu0 %v77
    %657 = vmatpush.msra.mxu0 %v73
    %658 = vmatpush.msra.mxu0 %v69
    %659 = vmatpush.msra.mxu0 %v65
    %660 = vmatpush.msra.mxu0 %v61
    %661 = vmatpush.msra.mxu0 %v57
    %662 = vmatpush.msra.mxu0 %v53
    %663 = vmatmul.f32.gmra.mxu0 %v46
    %v664 = vpop.f32.mrf.mxu0
    %v665 = vadd.f32 %v405, %v664
    %666 = vdwg.mxu0
    %667 = vmatpush.msra.mxu0 %v177
    %668 = vmatpush.msra.mxu0 %v173
    %669 = vmatpush.msra.mxu0 %v169
    %670 = vmatpush.msra.mxu0 %v165
    %671 = vmatpush.msra.mxu0 %v161
    %672 = vmatpush.msra.mxu0 %v157
    %673 = vmatpush.msra.mxu0 %v153
    %674 = vmatpush.msra.mxu0 %v149
    %675 = vmatpush.msra.mxu0 %v145
    %676 = vmatpush.msra.mxu0 %v141
    %677 = vmatpush.msra.mxu0 %v137
    %678 = vmatpush.msra.mxu0 %v133
    %679 = vmatpush.msra.mxu0 %v129
    %680 = vmatpush.msra.mxu0 %v125
    %681 = vmatpush.msra.mxu0 %v121
    %682 = vmatpush.msra.mxu0 %v117
    %683 = vmatmul.f32.gmra.mxu0 %v47
    %v684 = vpop.f32.mrf.mxu0
    %v685 = vadd.f32 %v665, %v684
    %686 = vdwg.mxu0
    %687 = vmatpush.msra.mxu0 %v241
    %688 = vmatpush.msra.mxu0 %v237
    %689 = vmatpush.msra.mxu0 %v233
    %690 = vmatpush.msra.mxu0 %v229
    %691 = vmatpush.msra.mxu0 %v225
    %692 = vmatpush.msra.mxu0 %v221
    %693 = vmatpush.msra.mxu0 %v217
    %694 = vmatpush.msra.mxu0 %v213
    %695 = vmatpush.msra.mxu0 %v209
    %696 = vmatpush.msra.mxu0 %v205
    %697 = vmatpush.msra.mxu0 %v201
    %698 = vmatpush.msra.mxu0 %v197
    %699 = vmatpush.msra.mxu0 %v193
    %700 = vmatpush.msra.mxu0 %v189
    %701 = vmatpush.msra.mxu0 %v185
    %702 = vmatpush.msra.mxu0 %v181
    %703 = vmatmul.f32.gmra.mxu0 %v48
    %v704 = vpop.f32.mrf.mxu0
    %v705 = vadd.f32 %v685, %v704
    %706 = vdwg.mxu0
    %707 = vmatpush.msra.mxu0 %v305
    %708 = vmatpush.msra.mxu0 %v301
    %709 = vmatpush.msra.mxu0 %v297
    %710 = vmatpush.msra.mxu0 %v293
    %711 = vmatpush.msra.mxu0 %v289
    %712 = vmatpush.msra.mxu0 %v285
    %713 = vmatpush.msra.mxu0 %v281
    %714 = vmatpush.msra.mxu0 %v277
    %715 = vmatpush.msra.mxu0 %v273
    %716 = vmatpush.msra.mxu0 %v269
    %717 = vmatpush.msra.mxu0 %v265
    %718 = vmatpush.msra.mxu0 %v261
    %719 = vmatpush.msra.mxu0 %v257
    %720 = vmatpush.msra.mxu0 %v253
    %721 = vmatpush.msra.mxu0 %v249
    %722 = vmatpush.msra.mxu0 %v245
    %723 = vmatmul.f32.gmra.mxu0 %v49
    %v724 = vpop.f32.mrf.mxu0
    %v725 = vadd.f32 %v705, %v724
    %726 = vdwg.mxu0
    %v727 = vld [vmem:[%s4] sm:$0xf]
    %v729 = vperm.slane %v727, 0
    %v730 = vperm.slane %v727, 1
    %v731 = vperm.slane %v727, 2
    %v732 = vperm.slane %v727, 3
    %v737 = vadd.f32 %v485, %v729
    %v738 = vadd.f32 %v565, %v730
    %v739 = vadd.f32 %v645, %v731
    %v740 = vadd.f32 %v725, %v732
    %v741 = vtanh.pop %v737
    %v742 = vtanh.pop %v738
    %v743 = vtanh.pop %v739
    %v744 = vtanh.pop %v740
    %v745 = vld [vmem:[%s5] sm:$0xff]
    %v746 = vld [vmem:[%s5 + $0x8] sm:$0xff]
    %v747 = vld [vmem:[%s5 + $0x10] sm:$0xff]
    %v748 = vld [vmem:[%s5 + $0x18] sm:$0xff]
    %v749 = vld [vmem:[%s5 + $0x20] sm:$0xff]
    %v750 = vld [vmem:[%s5 + $0x28] sm:$0xff]
    %v751 = vld [vmem:[%s5 + $0x30] sm:$0xff]
    %v752 = vld [vmem:[%s5 + $0x38] sm:$0xff]
    %v753 = vld [vmem:[%s5 + $0x40] sm:$0xff]
    %v754 = vld [vmem:[%s5 + $0x48] sm:$0xff]
    %v755 = vld [vmem:[%s5 + $0x50] sm:$0xff]
    %v756 = vld [vmem:[%s5 + $0x58] sm:$0xff]
    %v757 = vld [vmem:[%s5 + $0x60] sm:$0xff]
    %v758 = vld [vmem:[%s5 + $0x68] sm:$0xff]
    %v759 = vld [vmem:[%s5 + $0x70] sm:$0xff]
    %v760 = vld [vmem:[%s5 + $0x78] sm:$0xff]
    %v761 = vld [vmem:[%s5 + $0x80] sm:$0xff]
    %v762 = vld [vmem:[%s5 + $0x88] sm:$0xff]
    %v763 = vld [vmem:[%s5 + $0x90] sm:$0xff]
    %v764 = vld [vmem:[%s5 + $0x98] sm:$0xff]
    %v765 = vld [vmem:[%s5 + $0xa0] sm:$0xff]
    %v766 = vld [vmem:[%s5 + $0xa8] sm:$0xff]
    %v767 = vld [vmem:[%s5 + $0xb0] sm:$0xff]
    %v768 = vld [vmem:[%s5 + $0xb8] sm:$0xff]
    %v769 = vld [vmem:[%s5 + $0xc0] sm:$0xff]
    %v770 = vld [vmem:[%s5 + $0xc8] sm:$0xff]
    %v771 = vld [vmem:[%s5 + $0xd0] sm:$0xff]
    %v772 = vld [vmem:[%s5 + $0xd8] sm:$0xff]
    %v773 = vld [vmem:[%s5 + $0xe0] sm:$0xff]
    %v774 = vld [vmem:[%s5 + $0xe8] sm:$0xff]
    %v775 = vld [vmem:[%s5 + $0xf0] sm:$0xff]
    %v776 = vld [vmem:[%s5 + $0xf8] sm:$0xff]
    %v777 = vld [vmem:[%s5 + $0x100] sm:$0xff]
    %v778 = vld [vmem:[%s5 + $0x108] sm:$0xff]
    %v779 = vld [vmem:[%s5 + $0x110] sm:$0xff]
    %v780 = vld [vmem:[%s5 + $0x118] sm:$0xff]
    %v781 = vld [vmem:[%s5 + $0x120] sm:$0xff]
    %v782 = vld [vmem:[%s5 + $0x128] sm:$0xff]
    %v783 = vld [vmem:[%s5 + $0x130] sm:$0xff]
    %v784 = vld [vmem:[%s5 + $0x138] sm:$0xff]
    %v785 = vld [vmem:[%s5 + $0x140] sm:$0xff]
    %v786 = vld [vmem:[%s5 + $0x148] sm:$0xff]
    %v787 = vld [vmem:[%s5 + $0x150] sm:$0xff]
    %v788 = vld [vmem:[%s5 + $0x158] sm:$0xff]
    %v789 = vld [vmem:[%s5 + $0x160] sm:$0xff]
    %v790 = vld [vmem:[%s5 + $0x168] sm:$0xff]
    %v791 = vld [vmem:[%s5 + $0x170] sm:$0xff]
    %v792 = vld [vmem:[%s5 + $0x178] sm:$0xff]
    %v793 = vld [vmem:[%s5 + $0x180] sm:$0xff]
    %v794 = vld [vmem:[%s5 + $0x188] sm:$0xff]
    %v795 = vld [vmem:[%s5 + $0x190] sm:$0xff]
    %v796 = vld [vmem:[%s5 + $0x198] sm:$0xff]
    %v797 = vld [vmem:[%s5 + $0x1a0] sm:$0xff]
    %v798 = vld [vmem:[%s5 + $0x1a8] sm:$0xff]
    %v799 = vld [vmem:[%s5 + $0x1b0] sm:$0xff]
    %v800 = vld [vmem:[%s5 + $0x1b8] sm:$0xff]
    %v801 = vld [vmem:[%s5 + $0x1c0] sm:$0xff]
    %v802 = vld [vmem:[%s5 + $0x1c8] sm:$0xff]
    %v803 = vld [vmem:[%s5 + $0x1d0] sm:$0xff]
    %v804 = vld [vmem:[%s5 + $0x1d8] sm:$0xff]
    %v805 = vld [vmem:[%s5 + $0x1e0] sm:$0xff]
    %v806 = vld [vmem:[%s5 + $0x1e8] sm:$0xff]
    %v807 = vld [vmem:[%s5 + $0x1f0] sm:$0xff]
    %v808 = vld [vmem:[%s5 + $0x1f8] sm:$0xff]
    %809 = vmatpush.msra.mxu0 %v760
    %810 = vmatpush.msra.mxu0 %v759
    %811 = vmatpush.msra.mxu0 %v758
    %812 = vmatpush.msra.mxu0 %v757
    %813 = vmatpush.msra.mxu0 %v756
    %814 = vmatpush.msra.mxu0 %v755
    %815 = vmatpush.msra.mxu0 %v754
    %816 = vmatpush.msra.mxu0 %v753
    %817 = vmatpush.msra.mxu0 %v752
    %818 = vmatpush.msra.mxu0 %v751
    %819 = vmatpush.msra.mxu0 %v750
    %820 = vmatpush.msra.mxu0 %v749
    %821 = vmatpush.msra.mxu0 %v748
    %822 = vmatpush.msra.mxu0 %v747
    %823 = vmatpush.msra.mxu0 %v746
    %824 = vmatpush.msra.mxu0 %v745
    %825 = vmatmul.f32.gmra.mxu0 %v741
    %v826 = vpop.f32.mrf.mxu0
    %v827 = vadd.f32 0.0, %v826
    %828 = vdwg.mxu0
    %829 = vmatpush.msra.mxu0 %v776
    %830 = vmatpush.msra.mxu0 %v775
    %831 = vmatpush.msra.mxu0 %v774
    %832 = vmatpush.msra.mxu0 %v773
    %833 = vmatpush.msra.mxu0 %v772
    %834 = vmatpush.msra.mxu0 %v771
    %835 = vmatpush.msra.mxu0 %v770
    %836 = vmatpush.msra.mxu0 %v769
    %837 = vmatpush.msra.mxu0 %v768
    %838 = vmatpush.msra.mxu0 %v767
    %839 = vmatpush.msra.mxu0 %v766
    %840 = vmatpush.msra.mxu0 %v765
    %841 = vmatpush.msra.mxu0 %v764
    %842 = vmatpush.msra.mxu0 %v763
    %843 = vmatpush.msra.mxu0 %v762
    %844 = vmatpush.msra.mxu0 %v761
    %845 = vmatmul.f32.gmra.mxu0 %v742
    %v846 = vpop.f32.mrf.mxu0
    %v847 = vadd.f32 %v827, %v846
    %848 = vdwg.mxu0
    %849 = vmatpush.msra.mxu0 %v792
    %850 = vmatpush.msra.mxu0 %v791
    %851 = vmatpush.msra.mxu0 %v790
    %852 = vmatpush.msra.mxu0 %v789
    %853 = vmatpush.msra.mxu0 %v788
    %854 = vmatpush.msra.mxu0 %v787
    %855 = vmatpush.msra.mxu0 %v786
    %856 = vmatpush.msra.mxu0 %v785
    %857 = vmatpush.msra.mxu0 %v784
    %858 = vmatpush.msra.mxu0 %v783
    %859 = vmatpush.msra.mxu0 %v782
    %860 = vmatpush.msra.mxu0 %v781
    %861 = vmatpush.msra.mxu0 %v780
    %862 = vmatpush.msra.mxu0 %v779
    %863 = vmatpush.msra.mxu0 %v778
    %864 = vmatpush.msra.mxu0 %v777
    %865 = vmatmul.f32.gmra.mxu0 %v743
    %v866 = vpop.f32.mrf.mxu0
    %v867 = vadd.f32 %v847, %v866
    %868 = vdwg.mxu0
    %869 = vmatpush.msra.mxu0 %v808
    %870 = vmatpush.msra.mxu0 %v807
    %871 = vmatpush.msra.mxu0 %v806
    %872 = vmatpush.msra.mxu0 %v805
    %873 = vmatpush.msra.mxu0 %v804
    %874 = vmatpush.msra.mxu0 %v803
    %875 = vmatpush.msra.mxu0 %v802
    %876 = vmatpush.msra.mxu0 %v801
    %877 = vmatpush.msra.mxu0 %v800
    %878 = vmatpush.msra.mxu0 %v799
    %879 = vmatpush.msra.mxu0 %v798
    %880 = vmatpush.msra.mxu0 %v797
    %881 = vmatpush.msra.mxu0 %v796
    %882 = vmatpush.msra.mxu0 %v795
    %883 = vmatpush.msra.mxu0 %v794
    %884 = vmatpush.msra.mxu0 %v793
    %885 = vmatmul.f32.gmra.mxu0 %v744
    %v886 = vpop.f32.mrf.mxu0
    %v887 = vadd.f32 %v867, %v886
    %888 = vdwg.mxu0
    %vm889 = vcmask 130048
    %v890 = vsel %vm889, %v887, -inf
    %891 = vmax.xlane.f32.xlu0 %v890
    %v892 = vpop.xlane.xlu0 %891
    %v893 = vsub.f32 %v887, %v892
    %v894 = vmul.f32 %v893, 1.442695
    %v895 = vpow.pop %v894
    %v896 = vsel %vm889, %v895, 0.0
    %897 = vadd.xlane.f32.xlu0 %v896
    %v898 = vpop.xlane.xlu0 %897
    %v899 = vlog2.pop %v898
    %v900 = vmul.f32 %v899, 0.6931472
    %v901 = vadd.f32 %v900, %v892
    %v902 = vsub.f32 %v887, %v901
    %v903 = vld [vmem:[%s6] sm:$0xff]
    %v904 = vld [vmem:[%s6 + $0x8] sm:$0xff]
    %v905 = vld [vmem:[%s6 + $0x10] sm:$0xff]
    %v906 = vld [vmem:[%s6 + $0x18] sm:$0xff]
    %v907 = vld [vmem:[%s6 + $0x20] sm:$0xff]
    %v908 = vld [vmem:[%s6 + $0x28] sm:$0xff]
    %v909 = vld [vmem:[%s6 + $0x30] sm:$0xff]
    %v910 = vld [vmem:[%s6 + $0x38] sm:$0xff]
    %v912 = vsel %vm889, %v902, 0
    %914 = vmatpush.msra.mxu0 0.0
    %915 = vmatpush.msra.mxu0 0.0
    %916 = vmatpush.msra.mxu0 0.0
    %917 = vmatpush.msra.mxu0 0.0
    %918 = vmatpush.msra.mxu0 0.0
    %919 = vmatpush.msra.mxu0 0.0
    %920 = vmatpush.msra.mxu0 0.0
    %921 = vmatpush.msra.mxu0 0.0
    %922 = vmatpush.msra.mxu0 0.0
    %923 = vmatpush.msra.mxu0 0.0
    %924 = vmatpush.msra.mxu0 0.0
    %925 = vmatpush.msra.mxu0 0.0
    %926 = vmatpush.msra.mxu0 0.0
    %927 = vmatpush.msra.mxu0 0.0
    %928 = vmatpush.msra.mxu0 %v907
    %929 = vmatpush.msra.mxu0 %v903
    %930 = vmatmul.f32.gmra.mxu0 %v912
    %v931 = vpop.f32.mrf.mxu0
    %v932 = vadd.f32 0.0, %v931
    %933 = vdwg.mxu0
    %934 = vmatpush.msra.mxu0 0.0
    %935 = vmatpush.msra.mxu0 0.0
    %936 = vmatpush.msra.mxu0 0.0
    %937 = vmatpush.msra.mxu0 0.0
    %938 = vmatpush.msra.mxu0 0.0
    %939 = vmatpush.msra.mxu0 0.0
    %940 = vmatpush.msra.mxu0 0.0
    %941 = vmatpush.msra.mxu0 0.0
    %942 = vmatpush.msra.mxu0 0.0
    %943 = vmatpush.msra.mxu0 0.0
    %944 = vmatpush.msra.mxu0 0.0
    %945 = vmatpush.msra.mxu0 0.0
    %946 = vmatpush.msra.mxu0 0.0
    %947 = vmatpush.msra.mxu0 0.0
    %948 = vmatpush.msra.mxu0 %v908
    %949 = vmatpush.msra.mxu0 %v904
    %950 = vmatmul.f32.gmra.mxu0 %v912
    %v951 = vpop.f32.mrf.mxu0
    %v952 = vadd.f32 0.0, %v951
    %953 = vdwg.mxu0
    %954 = vmatpush.msra.mxu0 0.0
    %955 = vmatpush.msra.mxu0 0.0
    %956 = vmatpush.msra.mxu0 0.0
    %957 = vmatpush.msra.mxu0 0.0
    %958 = vmatpush.msra.mxu0 0.0
    %959 = vmatpush.msra.mxu0 0.0
    %960 = vmatpush.msra.mxu0 0.0
    %961 = vmatpush.msra.mxu0 0.0
    %962 = vmatpush.msra.mxu0 0.0
    %963 = vmatpush.msra.mxu0 0.0
    %964 = vmatpush.msra.mxu0 0.0
    %965 = vmatpush.msra.mxu0 0.0
    %966 = vmatpush.msra.mxu0 0.0
    %967 = vmatpush.msra.mxu0 0.0
    %968 = vmatpush.msra.mxu0 %v909
    %969 = vmatpush.msra.mxu0 %v905
    %970 = vmatmul.f32.gmra.mxu0 %v912
    %v971 = vpop.f32.mrf.mxu0
    %v972 = vadd.f32 0.0, %v971
    %973 = vdwg.mxu0
    %974 = vmatpush.msra.mxu0 0.0
    %975 = vmatpush.msra.mxu0 0.0
    %976 = vmatpush.msra.mxu0 0.0
    %977 = vmatpush.msra.mxu0 0.0
    %978 = vmatpush.msra.mxu0 0.0
    %979 = vmatpush.msra.mxu0 0.0
    %980 = vmatpush.msra.mxu0 0.0
    %981 = vmatpush.msra.mxu0 0.0
    %982 = vmatpush.msra.mxu0 0.0
    %983 = vmatpush.msra.mxu0 0.0
    %984 = vmatpush.msra.mxu0 0.0
    %985 = vmatpush.msra.mxu0 0.0
    %986 = vmatpush.msra.mxu0 0.0
    %987 = vmatpush.msra.mxu0 0.0
    %988 = vmatpush.msra.mxu0 %v910
    %989 = vmatpush.msra.mxu0 %v906
    %990 = vmatmul.f32.gmra.mxu0 %v912
    %v991 = vpop.f32.mrf.mxu0
    %v992 = vadd.f32 0.0, %v991
    %993 = vdwg.mxu0
    %v994 = vmul.f32 %v46, %v932
    %v995 = vmul.f32 %v47, %v952
    %v996 = vmul.f32 %v48, %v972
    %v997 = vmul.f32 %v49, %v992
    %v998 = vld [vmem:[%s7] sm:$0xff]
    %v999 = vld [vmem:[%s7 + $0x8] sm:$0xff]
    %v1000 = vld [vmem:[%s7 + $0x10] sm:$0xff]
    %v1001 = vld [vmem:[%s7 + $0x18] sm:$0xff]
    %v1002 = vld [vmem:[%s7 + $0x20] sm:$0xff]
    %v1003 = vld [vmem:[%s7 + $0x28] sm:$0xff]
    %v1004 = vld [vmem:[%s7 + $0x30] sm:$0xff]
    %v1005 = vld [vmem:[%s7 + $0x38] sm:$0xff]
    %v1006 = vld [vmem:[%s7 + $0x40] sm:$0xff]
    %v1007 = vld [vmem:[%s7 + $0x48] sm:$0xff]
    %v1008 = vld [vmem:[%s7 + $0x50] sm:$0xff]
    %v1009 = vld [vmem:[%s7 + $0x58] sm:$0xff]
    %v1010 = vld [vmem:[%s7 + $0x60] sm:$0xff]
    %v1011 = vld [vmem:[%s7 + $0x68] sm:$0xff]
    %v1012 = vld [vmem:[%s7 + $0x70] sm:$0xff]
    %v1013 = vld [vmem:[%s7 + $0x78] sm:$0xff]
    %v1014 = vld [vmem:[%s7 + $0x80] sm:$0xff]
    %v1015 = vld [vmem:[%s7 + $0x88] sm:$0xff]
    %v1016 = vld [vmem:[%s7 + $0x90] sm:$0xff]
    %v1017 = vld [vmem:[%s7 + $0x98] sm:$0xff]
    %v1018 = vld [vmem:[%s7 + $0xa0] sm:$0xff]
    %v1019 = vld [vmem:[%s7 + $0xa8] sm:$0xff]
    %v1020 = vld [vmem:[%s7 + $0xb0] sm:$0xff]
    %v1021 = vld [vmem:[%s7 + $0xb8] sm:$0xff]
    %v1022 = vld [vmem:[%s7 + $0xc0] sm:$0xff]
    %v1023 = vld [vmem:[%s7 + $0xc8] sm:$0xff]
    %v1024 = vld [vmem:[%s7 + $0xd0] sm:$0xff]
    %v1025 = vld [vmem:[%s7 + $0xd8] sm:$0xff]
    %v1026 = vld [vmem:[%s7 + $0xe0] sm:$0xff]
    %v1027 = vld [vmem:[%s7 + $0xe8] sm:$0xff]
    %v1028 = vld [vmem:[%s7 + $0xf0] sm:$0xff]
    %v1029 = vld [vmem:[%s7 + $0xf8] sm:$0xff]
    %v1030 = vld [vmem:[%s7 + $0x100] sm:$0xff]
    %v1031 = vld [vmem:[%s7 + $0x108] sm:$0xff]
    %v1032 = vld [vmem:[%s7 + $0x110] sm:$0xff]
    %v1033 = vld [vmem:[%s7 + $0x118] sm:$0xff]
    %v1034 = vld [vmem:[%s7 + $0x120] sm:$0xff]
    %v1035 = vld [vmem:[%s7 + $0x128] sm:$0xff]
    %v1036 = vld [vmem:[%s7 + $0x130] sm:$0xff]
    %v1037 = vld [vmem:[%s7 + $0x138] sm:$0xff]
    %v1038 = vld [vmem:[%s7 + $0x140] sm:$0xff]
    %v1039 = vld [vmem:[%s7 + $0x148] sm:$0xff]
    %v1040 = vld [vmem:[%s7 + $0x150] sm:$0xff]
    %v1041 = vld [vmem:[%s7 + $0x158] sm:$0xff]
    %v1042 = vld [vmem:[%s7 + $0x160] sm:$0xff]
    %v1043 = vld [vmem:[%s7 + $0x168] sm:$0xff]
    %v1044 = vld [vmem:[%s7 + $0x170] sm:$0xff]
    %v1045 = vld [vmem:[%s7 + $0x178] sm:$0xff]
    %v1046 = vld [vmem:[%s7 + $0x180] sm:$0xff]
    %v1047 = vld [vmem:[%s7 + $0x188] sm:$0xff]
    %v1048 = vld [vmem:[%s7 + $0x190] sm:$0xff]
    %v1049 = vld [vmem:[%s7 + $0x198] sm:$0xff]
    %v1050 = vld [vmem:[%s7 + $0x1a0] sm:$0xff]
    %v1051 = vld [vmem:[%s7 + $0x1a8] sm:$0xff]
    %v1052 = vld [vmem:[%s7 + $0x1b0] sm:$0xff]
    %v1053 = vld [vmem:[%s7 + $0x1b8] sm:$0xff]
    %v1054 = vld [vmem:[%s7 + $0x1c0] sm:$0xff]
    %v1055 = vld [vmem:[%s7 + $0x1c8] sm:$0xff]
    %v1056 = vld [vmem:[%s7 + $0x1d0] sm:$0xff]
    %v1057 = vld [vmem:[%s7 + $0x1d8] sm:$0xff]
    %v1058 = vld [vmem:[%s7 + $0x1e0] sm:$0xff]
    %v1059 = vld [vmem:[%s7 + $0x1e8] sm:$0xff]
    %v1060 = vld [vmem:[%s7 + $0x1f0] sm:$0xff]
    %v1061 = vld [vmem:[%s7 + $0x1f8] sm:$0xff]
    %1062 = vmatpush.msra.mxu0 %v1013
    %1063 = vmatpush.msra.mxu0 %v1012
    %1064 = vmatpush.msra.mxu0 %v1011
    %1065 = vmatpush.msra.mxu0 %v1010
    %1066 = vmatpush.msra.mxu0 %v1009
    %1067 = vmatpush.msra.mxu0 %v1008
    %1068 = vmatpush.msra.mxu0 %v1007
    %1069 = vmatpush.msra.mxu0 %v1006
    %1070 = vmatpush.msra.mxu0 %v1005
    %1071 = vmatpush.msra.mxu0 %v1004
    %1072 = vmatpush.msra.mxu0 %v1003
    %1073 = vmatpush.msra.mxu0 %v1002
    %1074 = vmatpush.msra.mxu0 %v1001
    %1075 = vmatpush.msra.mxu0 %v1000
    %1076 = vmatpush.msra.mxu0 %v999
    %1077 = vmatpush.msra.mxu0 %v998
    %1078 = vmatmul.f32.gmra.mxu0 %v994
    %v1079 = vpop.f32.mrf.mxu0
    %v1080 = vadd.f32 0.0, %v1079
    %1081 = vdwg.mxu0
    %1082 = vmatpush.msra.mxu0 %v1029
    %1083 = vmatpush.msra.mxu0 %v1028
    %1084 = vmatpush.msra.mxu0 %v1027
    %1085 = vmatpush.msra.mxu0 %v1026
    %1086 = vmatpush.msra.mxu0 %v1025
    %1087 = vmatpush.msra.mxu0 %v1024
    %1088 = vmatpush.msra.mxu0 %v1023
    %1089 = vmatpush.msra.mxu0 %v1022
    %1090 = vmatpush.msra.mxu0 %v1021
    %1091 = vmatpush.msra.mxu0 %v1020
    %1092 = vmatpush.msra.mxu0 %v1019
    %1093 = vmatpush.msra.mxu0 %v1018
    %1094 = vmatpush.msra.mxu0 %v1017
    %1095 = vmatpush.msra.mxu0 %v1016
    %1096 = vmatpush.msra.mxu0 %v1015
    %1097 = vmatpush.msra.mxu0 %v1014
    %1098 = vmatmul.f32.gmra.mxu0 %v995
    %v1099 = vpop.f32.mrf.mxu0
    %v1100 = vadd.f32 %v1080, %v1099
    %1101 = vdwg.mxu0
    %1102 = vmatpush.msra.mxu0 %v1045
    %1103 = vmatpush.msra.mxu0 %v1044
    %1104 = vmatpush.msra.mxu0 %v1043
    %1105 = vmatpush.msra.mxu0 %v1042
    %1106 = vmatpush.msra.mxu0 %v1041
    %1107 = vmatpush.msra.mxu0 %v1040
    %1108 = vmatpush.msra.mxu0 %v1039
    %1109 = vmatpush.msra.mxu0 %v1038
    %1110 = vmatpush.msra.mxu0 %v1037
    %1111 = vmatpush.msra.mxu0 %v1036
    %1112 = vmatpush.msra.mxu0 %v1035
    %1113 = vmatpush.msra.mxu0 %v1034
    %1114 = vmatpush.msra.mxu0 %v1033
    %1115 = vmatpush.msra.mxu0 %v1032
    %1116 = vmatpush.msra.mxu0 %v1031
    %1117 = vmatpush.msra.mxu0 %v1030
    %1118 = vmatmul.f32.gmra.mxu0 %v996
    %v1119 = vpop.f32.mrf.mxu0
    %v1120 = vadd.f32 %v1100, %v1119
    %1121 = vdwg.mxu0
    %1122 = vmatpush.msra.mxu0 %v1061
    %1123 = vmatpush.msra.mxu0 %v1060
    %1124 = vmatpush.msra.mxu0 %v1059
    %1125 = vmatpush.msra.mxu0 %v1058
    %1126 = vmatpush.msra.mxu0 %v1057
    %1127 = vmatpush.msra.mxu0 %v1056
    %1128 = vmatpush.msra.mxu0 %v1055
    %1129 = vmatpush.msra.mxu0 %v1054
    %1130 = vmatpush.msra.mxu0 %v1053
    %1131 = vmatpush.msra.mxu0 %v1052
    %1132 = vmatpush.msra.mxu0 %v1051
    %1133 = vmatpush.msra.mxu0 %v1050
    %1134 = vmatpush.msra.mxu0 %v1049
    %1135 = vmatpush.msra.mxu0 %v1048
    %1136 = vmatpush.msra.mxu0 %v1047
    %1137 = vmatpush.msra.mxu0 %v1046
    %1138 = vmatmul.f32.gmra.mxu0 %v997
    %v1139 = vpop.f32.mrf.mxu0
    %v1140 = vadd.f32 %v1120, %v1139
    %1141 = vdwg.mxu0
    %1142 = vst.msk [vmem:[#allocation5] sm:$0xff] %vm323, %v1140
    // Predicated region
    $region38: #{tpu_custom_call.1} parent=1 // pred_check
      _
    $region39: #{tpu_custom_call.1} parent=1 // pred_check_branch
      %1144 = sbr.rel (0) target = $region41
    $region40: #{tpu_custom_call.1} parent=1 // pred_region
      %1146 = vsyncadd [#allocation4], 0
      %s1148 = sshll.u32 [#allocation5], 4
      %s1149 = int_to_ptr.vmem [resolvable:$true] %s1148
      %s1150 = sshll.u32 %s8, 4
      %s1151 = int_to_ptr.hbm [resolvable:$true] %s1150
      %1153 = dma.vmem_to_hbm [thread:$0]  %s1149, 128, %s1151, [#allocation4]
    $region41: #{tpu_custom_call.1} parent=1 // pred_fallthru
      _
    // Predicated region
    $region42: #{tpu_custom_call.1} parent=1 // pred_check
      _
    $region43: #{tpu_custom_call.1} parent=1 // pred_check_branch
      %1155 = sbr.rel (0) target = $region45
    $region44: #{tpu_custom_call.1} parent=1 // pred_region
      %1157 = dma.done [#allocation4], 128
    $region45: #{tpu_custom_call.1} parent=1 // pred_fallthru
      _
    %1158 = vsyncpa [#allocation3], 1
    %1159 = vsyncpa [#allocation4], 1

</llo_original>
